<compile_context>
chip_gen: v5e
topology: v5e:2x2
jax: 0.10.0
libtpu: 0.0.40
codegen_flags: <defaults>
</compile_context>

<pallas_src>
import functools

import jax
import jax.numpy as jnp
from jax.experimental import pallas as pl
from jax.experimental.pallas import tpu as pltpu


def _round_up(x, m):
    return ((x + m - 1) // m) * m


def _pick_tiling(hw, c, x_itemsize, t_itemsize, tile_hw=None):
    """Choose (grid pixel tile, inner compute chunk, VMEM capacity)."""
    hw128 = _round_up(hw, 128)

    # Inner compute chunk (lanes): keep (C, chunk) f32 temporaries near the 256 KiB
    # vreg file so the math doesn't spill multi-hundred-KB temps to VMEM.
    chunk = 1024
    while chunk > 128 and c * chunk * 4 > (128 * 1024):
        chunk //= 2
    chunk = min(chunk, hw128)

    # Grid pixel tile (lanes): target ~2 MiB of logits per grid step...
    if tile_hw is None:
        tile = (2 << 20) // max(1, c * x_itemsize)
    else:
        tile = int(tile_hw)

    # ...clamped against a per-chip VMEM budget for the double-buffered input blocks.
    try:
        vmem_cap = int(pltpu.get_tpu_info().vmem_capacity_bytes)
    except Exception:
        vmem_cap = 64 << 20  # conservative fallback (v7x physical VMEM)
    per_lane_bytes = 2 * (c * x_itemsize + t_itemsize)   # x2 for double buffering
    tile = min(tile, (vmem_cap // 4) // per_lane_bytes)
    tile = min(tile, _round_up(hw, chunk))
    tile = max(chunk, (tile // chunk) * chunk)            # multiple of chunk (and 128)
    return tile, chunk, vmem_cap


def _unbiased_ce_kernel(x_ref, t_ref, loss_ref, cnt_ref, *,
                        old_cl, ignore_index, hw, tile_hw, chunk):
    """One (batch, pixel-tile) grid step -> two scalar partials (loss sum, valid cnt)."""
    j = pl.program_id(1)
    c = x_ref.shape[0]
    num_chunks = tile_hw // chunk
    ragged = (hw % tile_hw) != 0

    # Loop-invariant (C, 1) class-index column (no (C, tile) int32 iota per step).
    c_col = jax.lax.broadcasted_iota(jnp.int32, (c, 1), 0)

    def body(ci, carry):
        s_acc, n_acc = carry
        off = pl.multiple_of(ci * chunk, chunk)
        x = x_ref[:, pl.ds(off, chunk)].astype(jnp.float32)   # (C, chunk)
        t = t_ref[:, pl.ds(off, chunk)].astype(jnp.int32)     # (1, chunk)

        # Full logsumexp over all classes.
        m = jnp.max(x, axis=0, keepdims=True)                 # (1, chunk)
        e = jnp.exp(x - m)
        lse = m + jnp.log(jnp.sum(e, axis=0, keepdims=True))

        # Old-class logsumexp with its OWN shift: reusing exp(x - m) can flush every
        # old-class term to zero when the old logits sit ~88+ below the global max,
        # giving log(0) = -inf and a +inf loss.  old_cl is a Python constant -> static
        # slice; the extra exp is only over old_cl rows.
        x_old = x[:old_cl]
        m_old = jnp.max(x_old, axis=0, keepdims=True)
        lse_old = m_old + jnp.log(
            jnp.sum(jnp.exp(x_old - m_old), axis=0, keepdims=True))

        # x[target] via a sublane-broadcast compare.
        picked = jnp.sum(jnp.where(c_col == t, x, 0.0), axis=0, keepdims=True)

        # target <  old_cl -> remapped label 0 -> -logprob = lse - lse_old
        # target >= old_cl ->                    -logprob = lse - x[target]
        nll = jnp.where(t < old_cl, lse - lse_old, lse - picked)

        valid = t != ignore_index
        if ragged:
            # Mask the undefined HBM-padded tail.  Keep the masking a select
            # (jnp.where below) — never multiplicative — so NaN garbage can't leak.
            lane = jax.lax.broadcasted_iota(jnp.int32, (1, chunk), 1)
            valid = valid & ((j * tile_hw + off + lane) < hw)

        s_acc = s_acc + jnp.sum(jnp.where(valid, nll, 0.0), keepdims=True)
        n_acc = n_acc + jnp.sum(valid.astype(jnp.float32), keepdims=True)
        return s_acc, n_acc

    init = (jnp.zeros((1, 1), jnp.float32), jnp.zeros((1, 1), jnp.float32))
    s, n = jax.lax.fori_loop(0, num_chunks, body, init,
                             unroll=min(num_chunks, 8))

    loss_ref[...] = jnp.reshape(s, (1, 1, 1, 1))
    cnt_ref[...] = jnp.reshape(n, (1, 1, 1, 1))


def unbiased_cross_entropy(inputs, targets, *, old_cl, reduction="mean",
                           ignore_index=255, tile_hw=None):
    """JAX/Pallas equivalent of UnbiasedCrossEntropy.forward.

    inputs : (N, C, H, W) float logits (NCHW, like PyTorch; f32 or bf16)
    targets: (N, H, W)    integer labels (int32 / int16 / uint8; cast in-kernel)
    """
    if old_cl is None or int(old_cl) < 1:
        raise ValueError("old_cl must be a positive integer")
    n, c, h, w = inputs.shape
    hw = h * w
    x = inputs.reshape(n, c, hw)                 # free reshape, no HBM transpose
    t = targets.reshape(n, 1, hw)                # lane-dense target stream, stored dtype

    tile, chunk, vmem_cap = _pick_tiling(hw, c, inputs.dtype.itemsize,
                                         targets.dtype.itemsize, tile_hw)
    num_tiles = pl.cdiv(hw, tile)

    kernel = functools.partial(_unbiased_ce_kernel, old_cl=int(old_cl),
                               ignore_index=int(ignore_index), hw=hw,
                               tile_hw=tile, chunk=chunk)

    loss_part, cnt_part = pl.pallas_call(
        kernel,
        out_shape=(jax.ShapeDtypeStruct((n, num_tiles, 1, 1), jnp.float32),
                   jax.ShapeDtypeStruct((n, num_tiles, 1, 1), jnp.float32)),
        grid_spec=pltpu.PrefetchScalarGridSpec(
            num_scalar_prefetch=0,
            grid=(n, num_tiles),
            in_specs=[
                pl.BlockSpec((None, c, tile), lambda i, j: (i, 0, j)),
                pl.BlockSpec((None, 1, tile), lambda i, j: (i, 0, j)),
            ],
            out_specs=[
                pl.BlockSpec((1, 1, 1, 1), lambda i, j: (i, j, 0, 0)),
                pl.BlockSpec((1, 1, 1, 1), lambda i, j: (i, j, 0, 0)),
            ],
        ),
        compiler_params=pltpu.CompilerParams(
            dimension_semantics=("parallel", "parallel"),
            vmem_limit_bytes=int(min(vmem_cap // 2, 64 << 20))),
    )(x, t)

    loss_sum = jnp.sum(loss_part)
    valid_cnt = jnp.sum(cnt_part)
    if reduction == "mean":
        return loss_sum / valid_cnt
    elif reduction == "sum":
        return loss_sum
    else:
        # TODO(synk): reduction='none' (per-pixel loss map output) not implemented.
        raise NotImplementedError("Only 'mean' and 'sum' reductions supported.")


def _reference(inputs, targets, *, old_cl, ignore_index=255):
    """Pure-JAX reference mirroring the PyTorch module (reduction='mean')."""
    den = jax.nn.logsumexp(inputs, axis=1)                       # (N, H, W)
    lse_old = jax.nn.logsumexp(inputs[:, :old_cl], axis=1)       # (N, H, W)
    valid = targets != ignore_index
    gathered = jnp.take_along_axis(
        inputs, jnp.clip(targets, 0, inputs.shape[1] - 1)[:, None], axis=1
    )[:, 0]                                                      # (N, H, W)
    log_prob = jnp.where(targets < old_cl, lse_old - den, gathered - den)
    nll = jnp.where(valid, -log_prob, 0.0)
    return jnp.sum(nll) / jnp.sum(valid)


if __name__ == "__main__":
    key = jax.random.PRNGKey(0)
    k1, k2, k3, k4, k5, k6 = jax.random.split(key, 6)
    IGNORE = 255

    # Case 1: lane-aligned spatial size (hw % 128 == 0).
    N, C, H, W = 2, 6, 16, 16
    OLD_CL = 3
    inputs = jax.random.normal(k1, (N, C, H, W), dtype=jnp.float32) * 2.0
    targets = jax.random.randint(k2, (N, H, W), 0, C, dtype=jnp.int32)
    targets = jnp.where(jax.random.uniform(k3, (N, H, W)) < 0.1, IGNORE, targets)

    loss = unbiased_cross_entropy(inputs, targets, old_cl=OLD_CL,
                                  reduction="mean", ignore_index=IGNORE)
    loss = jax.block_until_ready(loss)
    ref = _reference(inputs, targets, old_cl=OLD_CL, ignore_index=IGNORE)
    assert jnp.allclose(loss, ref, rtol=1e-5, atol=1e-5), (loss, ref)

    # Case 2: ragged spatial size + N=1 (exercises the in-kernel tail mask).
    N2, C2, H2, W2 = 1, 7, 15, 13
    OLD2 = 4
    inp2 = jax.random.normal(k4, (N2, C2, H2, W2), dtype=jnp.float32) * 3.0
    tgt2 = jax.random.randint(k5, (N2, H2, W2), 0, C2, dtype=jnp.int32)
    tgt2 = jnp.where(jax.random.uniform(k6, (N2, H2, W2)) < 0.1, IGNORE, tgt2)

    loss2 = jax.block_until_ready(
        unbiased_cross_entropy(inp2, tgt2, old_cl=OLD2,
                               reduction="mean", ignore_index=IGNORE))
    ref2 = _reference(inp2, tgt2, old_cl=OLD2, ignore_index=IGNORE)
    assert jnp.allclose(loss2, ref2, rtol=1e-5, atol=1e-5), (loss2, ref2)

    print("KERNEL_OK")
</pallas_src>

<mosaic_0001>
module attributes {stable_mosaic.version = 11 : i64} {
  func.func @_unbiased_ce_kernel(%arg0: i32, %arg1: i32, %arg2: memref<1x6x256xf32, #tpu.memory_space<vmem>>, %arg3: memref<1x1x256xi32, #tpu.memory_space<vmem>>, %arg4: memref<1x1x1x1xf32, #tpu.memory_space<vmem>>, %arg5: memref<1x1x1x1xf32, #tpu.memory_space<vmem>>) attributes {dimension_semantics = [#tpu.dimension_semantics<parallel>, #tpu.dimension_semantics<parallel>], iteration_bounds = array<i64: 2, 1>, scalar_prefetch = 0 : i64, scratch_operands = 0 : i64, tpu.core_type = #tpu.core_type<tc>, window_params = [{transform_indices = @transform_0, window_bounds = array<i64: 1, 6, 256>}, {transform_indices = @transform_1, window_bounds = array<i64: 1, 1, 256>}, {transform_indices = @transform_2, window_bounds = array<i64: 1, 1, 1, 1>}, {transform_indices = @transform_3, window_bounds = array<i64: 1, 1, 1, 1>}]} {
    %0 = tpu.iota {dimensions = array<i32: 0>} : vector<6x1xi32>
    %cst = arith.constant 0.000000e+00 : f32
    %1 = vector.broadcast %cst : f32 to vector<1x1xf32>
    %cst_0 = arith.constant 0.000000e+00 : f32
    %2 = vector.broadcast %cst_0 : f32 to vector<1x1xf32>
    %c0_i32 = arith.constant 0 : i32
    %c256_i32 = arith.constant 256 : i32
    %3 = arith.muli %c0_i32, %c256_i32 : i32
    %4 = tpu.assume_multiple %3, 256 : i32
    %c0 = arith.constant 0 : index
    %c0_1 = arith.constant 0 : index
    %5 = arith.index_cast %4 : i32 to index
    %6 = vector.load %arg2[%c0, %c0_1, %5] : memref<1x6x256xf32, #tpu.memory_space<vmem>>, vector<1x6x256xf32>
    %7 = vector.shape_cast %6 : vector<1x6x256xf32> to vector<6x256xf32>
    %c0_2 = arith.constant 0 : index
    %c0_3 = arith.constant 0 : index
    %8 = arith.index_cast %4 : i32 to index
    %9 = vector.load %arg3[%c0_2, %c0_3, %8] : memref<1x1x256xi32, #tpu.memory_space<vmem>>, vector<1x1x256xi32>
    %10 = vector.shape_cast %9 : vector<1x1x256xi32> to vector<1x256xi32>
    %cst_4 = arith.constant dense<0xFF800000> : vector<256xf32>
    %11 = vector.multi_reduction <maximumf>, %7, %cst_4 [0] : vector<6x256xf32> to vector<256xf32>
    %12 = vector.shape_cast %11 : vector<256xf32> to vector<1x256xf32>
    %13 = vector.broadcast %12 : vector<1x256xf32> to vector<6x256xf32>
    %14 = arith.subf %7, %13 : vector<6x256xf32>
    %15 = math.exp %14 : vector<6x256xf32>
    %cst_5 = arith.constant dense<0.000000e+00> : vector<256xf32>
    %16 = vector.multi_reduction <add>, %15, %cst_5 [0] : vector<6x256xf32> to vector<256xf32>
    %17 = vector.shape_cast %16 : vector<256xf32> to vector<1x256xf32>
    %18 = math.log %17 : vector<1x256xf32>
    %19 = arith.addf %12, %18 : vector<1x256xf32>
    %20 = vector.extract_strided_slice %7 {offsets = [0, 0], sizes = [3, 256], strides = [1, 1]} : vector<6x256xf32> to vector<3x256xf32>
    %cst_6 = arith.constant dense<0xFF800000> : vector<256xf32>
    %21 = vector.multi_reduction <maximumf>, %20, %cst_6 [0] : vector<3x256xf32> to vector<256xf32>
    %22 = vector.shape_cast %21 : vector<256xf32> to vector<1x256xf32>
    %23 = vector.broadcast %22 : vector<1x256xf32> to vector<3x256xf32>
    %24 = arith.subf %20, %23 : vector<3x256xf32>
    %25 = math.exp %24 : vector<3x256xf32>
    %cst_7 = arith.constant dense<0.000000e+00> : vector<256xf32>
    %26 = vector.multi_reduction <add>, %25, %cst_7 [0] : vector<3x256xf32> to vector<256xf32>
    %27 = vector.shape_cast %26 : vector<256xf32> to vector<1x256xf32>
    %28 = math.log %27 : vector<1x256xf32>
    %29 = arith.addf %22, %28 : vector<1x256xf32>
    %30 = vector.broadcast %0 : vector<6x1xi32> to vector<6x256xi32>
    %31 = vector.broadcast %10 : vector<1x256xi32> to vector<6x256xi32>
    %32 = arith.cmpi eq, %30, %31 : vector<6x256xi32>
    %cst_8 = arith.constant 0.000000e+00 : f32
    %33 = vector.broadcast %cst_8 : f32 to vector<6x256xf32>
    %34 = arith.select %32, %7, %33 : vector<6x256xi1>, vector<6x256xf32>
    %cst_9 = arith.constant dense<0.000000e+00> : vector<256xf32>
    %35 = vector.multi_reduction <add>, %34, %cst_9 [0] : vector<6x256xf32> to vector<256xf32>
    %36 = vector.shape_cast %35 : vector<256xf32> to vector<1x256xf32>
    %c3_i32 = arith.constant 3 : i32
    %37 = vector.broadcast %c3_i32 : i32 to vector<1x256xi32>
    %38 = arith.cmpi slt, %10, %37 : vector<1x256xi32>
    %39 = arith.subf %19, %29 : vector<1x256xf32>
    %40 = arith.subf %19, %36 : vector<1x256xf32>
    %41 = arith.select %38, %39, %40 : vector<1x256xi1>, vector<1x256xf32>
    %c255_i32 = arith.constant 255 : i32
    %42 = vector.broadcast %c255_i32 : i32 to vector<1x256xi32>
    %43 = arith.cmpi ne, %10, %42 : vector<1x256xi32>
    %cst_10 = arith.constant 0.000000e+00 : f32
    %44 = vector.broadcast %cst_10 : f32 to vector<1x256xf32>
    %45 = arith.select %43, %41, %44 : vector<1x256xi1>, vector<1x256xf32>
    %46 = vector.shape_cast %45 : vector<1x256xf32> to vector<1x1x256xf32>
    %cst_11 = arith.constant dense<0.000000e+00> : vector<1xf32>
    %47 = vector.multi_reduction <add>, %46, %cst_11 [1, 2] : vector<1x1x256xf32> to vector<1xf32>
    %48 = vector.shape_cast %47 : vector<1xf32> to vector<1x1x1xf32>
    %49 = vector.extract %48[0, 0, 0] : f32 from vector<1x1x1xf32>
    %50 = vector.broadcast %49 : f32 to vector<1x1xf32>
    %51 = arith.addf %1, %50 : vector<1x1xf32>
    %52 = arith.extui %43 : vector<1x256xi1> to vector<1x256xi32>
    %53 = arith.sitofp %52 : vector<1x256xi32> to vector<1x256xf32>
    %54 = vector.shape_cast %53 : vector<1x256xf32> to vector<1x1x256xf32>
    %cst_12 = arith.constant dense<0.000000e+00> : vector<1xf32>
    %55 = vector.multi_reduction <add>, %54, %cst_12 [1, 2] : vector<1x1x256xf32> to vector<1xf32>
    %56 = vector.shape_cast %55 : vector<1xf32> to vector<1x1x1xf32>
    %57 = vector.extract %56[0, 0, 0] : f32 from vector<1x1x1xf32>
    %58 = vector.broadcast %57 : f32 to vector<1x1xf32>
    %59 = arith.addf %2, %58 : vector<1x1xf32>
    %c1_i32 = arith.constant 1 : i32
    %60 = vector.shape_cast %51 : vector<1x1xf32> to vector<1x1x1x1xf32>
    %c0_13 = arith.constant 0 : index
    %c0_14 = arith.constant 0 : index
    %c0_15 = arith.constant 0 : index
    %c0_16 = arith.constant 0 : index
    %61 = vector.load %arg4[%c0_13, %c0_14, %c0_15, %c0_16] : memref<1x1x1x1xf32, #tpu.memory_space<vmem>>, vector<1x1x1x1xf32>
    tpu.vector_store %arg4[%c0_13, %c0_14, %c0_15, %c0_16], %60 {strides = array<i32>} : memref<1x1x1x1xf32, #tpu.memory_space<vmem>>, vector<1x1x1x1xf32>,
    %62 = vector.shape_cast %59 : vector<1x1xf32> to vector<1x1x1x1xf32>
    %c0_17 = arith.constant 0 : index
    %c0_18 = arith.constant 0 : index
    %c0_19 = arith.constant 0 : index
    %c0_20 = arith.constant 0 : index
    %63 = vector.load %arg5[%c0_17, %c0_18, %c0_19, %c0_20] : memref<1x1x1x1xf32, #tpu.memory_space<vmem>>, vector<1x1x1x1xf32>
    tpu.vector_store %arg5[%c0_17, %c0_18, %c0_19, %c0_20], %62 {strides = array<i32>} : memref<1x1x1x1xf32, #tpu.memory_space<vmem>>, vector<1x1x1x1xf32>,
    return
  }
  func.func @transform_0(%arg0: i32, %arg1: i32) -> (i32, i32, i32) {
    %c0_i32 = arith.constant 0 : i32
    %c0_i32_0 = arith.constant 0 : i32
    return %arg0, %c0_i32, %arg1 : i32, i32, i32
  }
  func.func @transform_1(%arg0: i32, %arg1: i32) -> (i32, i32, i32) {
    %c0_i32 = arith.constant 0 : i32
    %c0_i32_0 = arith.constant 0 : i32
    return %arg0, %c0_i32, %arg1 : i32, i32, i32
  }
  func.func @transform_2(%arg0: i32, %arg1: i32) -> (i32, i32, i32, i32) {
    %c0_i32 = arith.constant 0 : i32
    %c0_i32_0 = arith.constant 0 : i32
    %c0_i32_1 = arith.constant 0 : i32
    return %arg0, %arg1, %c0_i32, %c0_i32_0 : i32, i32, i32, i32
  }
  func.func @transform_3(%arg0: i32, %arg1: i32) -> (i32, i32, i32, i32) {
    %c0_i32 = arith.constant 0 : i32
    %c0_i32_0 = arith.constant 0 : i32
    %c0_i32_1 = arith.constant 0 : i32
    return %arg0, %arg1, %c0_i32, %c0_i32_0 : i32, i32, i32, i32
  }
}

</mosaic_0001>

<llo_original>
// kernel: tpu_custom_call.1
$region0: #{tpu_custom_call.1}
  #allocation0 [shape = 'u32[]', space=smem, size = 0x4, offset = 0x4, fixed_abs, tag = 'smem constant byte address 0x4 - core index']
  #allocation1 [shape = 'u32[72,128]{1,0:T(1,128)}', space=vmem, size = 0x9000, scoped, tag = 'internal scratch']
  %s0 = inlined_call_operand.vmem [shape: f32[2,6,256], index: 0, kind: input, shape index: {}]
  %s1 = inlined_call_operand.vmem [shape: s32[2,1,256], index: 1, kind: input, shape index: {}]
  %s2 = inlined_call_operand.vmem [shape: f32[2,1,1,1], index: 2, kind: output, shape index: {0}]
  %s3 = inlined_call_operand.vmem [shape: f32[2,1,1,1], index: 3, kind: output, shape index: {1}]
  %4 = xla_tuple %s2, %s3
  %s5 = sld [smem:[#allocation0]]
  $region49: #{tpu_custom_call.1} parent=0
    _
  %s7 = ssub.s32 1, %s5
  %s8 = scalar_select 0, %s7, %s5
  loop: start=0, step=1, limit=4
  $region2: #{tpu_custom_call.1} parent=0 // loop_pre_header
    _
  $region3: #{tpu_custom_call.1} parent=0 // loop_header
    %s10 = sphi 0, %s14
    %p11 = scmp.ge.s32.totalorder %s10, 4
    %s17 = sphi 0, %s29
    %s18 = sphi 0, %s25
    %s19 = sphi 0, %s17
    %s20 = sphi 0, %s18
    %s21 = sphi 0, %s19
    %s22 = sphi 0, %s20
    %s34 = sphi 0, %s36
    %s37 = sphi 0, %s34
    %s38 = sphi 0, %s37
    %s54 = sphi 0, %s38
    %s62 = sphi 0, %s64
    %s65 = sphi 0, %s62
    %s66 = sphi 0, %s65
    %s82 = sphi 0, %s66
    %s90 = sphi 0, %s92
    %s93 = sphi 0, %s90
    %s94 = sphi 0, %s93
    %s110 = sphi 0, %s94
    %s118 = sphi 0, %s120
    %s121 = sphi 0, %s118
    %s122 = sphi 0, %s121
    %s138 = sphi 0, %s122
  $region4: #{tpu_custom_call.1} parent=0 // loop_header_branch
    %13 = sbr.rel (%p11) target = $region8
  $region5: #{tpu_custom_call.1} parent=0 // loop_body
    %s15 = ssub.s32 %s10, 1
    %s16 = ssub.s32 %s10, 2
    %s23 = sadd.s32 1, %s18
    %p24 = scmp.ge.s32.totalorder %s23, 1
    %s25 = scalar_select %p24, 0, %s23
    %s26 = sadd.s32 1, %s17
    %s27 = scalar_select %p24, %s26, %s17
    %p28 = scmp.ge.s32.totalorder %s27, 2
    %s29 = scalar_select %p28, 0, %s27
    %s30 = ssub.s32 %s17, %s29
    %s31 = ssub.s32 %s18, %s25
    %s32 = sor.u32 %s30, %s31
    %p33 = scmp.eq.s32.totalorder %s32, 0
    %s35 = sadd.s32 %s34, 1
    %s36 = scalar_select %p33, %s34, %s35
    %p39 = pneg %p33
    %p40 = scmp.eq.s32.totalorder %s10, 1
    %p41 = por %p39, %p40
    %p42 = scmp.ne.s32.totalorder %s34, %s37
    %p43 = scmp.eq.s32.totalorder %s10, 0
    %p44 = por %p42, %p43
    %p45 = scmp.ne.s32.totalorder %s34, %s37
    %p46 = scmp.eq.s32.totalorder %s15, 1
    %p47 = por %p45, %p46
    %p48 = scmp.ne.s32.totalorder %s37, %s38
    %p49 = scmp.eq.s32.totalorder %s15, 0
    %p50 = por %p48, %p49
    %p51 = scmp.ne.s32.totalorder %s37, %s38
    %p52 = scmp.eq.s32.totalorder %s16, 1
    %p53 = por %p51, %p52
    %p55 = scmp.ne.s32.totalorder %s38, %s54
    %p56 = scmp.eq.s32.totalorder %s16, 0
    %p57 = por %p55, %p56
    %s58 = ssub.s32 %s17, %s29
    %s59 = ssub.s32 %s18, %s25
    %s60 = sor.u32 %s58, %s59
    %p61 = scmp.eq.s32.totalorder %s60, 0
    %s63 = sadd.s32 %s62, 1
    %s64 = scalar_select %p61, %s62, %s63
    %p67 = pneg %p61
    %p68 = scmp.eq.s32.totalorder %s10, 1
    %p69 = por %p67, %p68
    %p70 = scmp.ne.s32.totalorder %s62, %s65
    %p71 = scmp.eq.s32.totalorder %s10, 0
    %p72 = por %p70, %p71
    %p73 = scmp.ne.s32.totalorder %s62, %s65
    %p74 = scmp.eq.s32.totalorder %s15, 1
    %p75 = por %p73, %p74
    %p76 = scmp.ne.s32.totalorder %s65, %s66
    %p77 = scmp.eq.s32.totalorder %s15, 0
    %p78 = por %p76, %p77
    %p79 = scmp.ne.s32.totalorder %s65, %s66
    %p80 = scmp.eq.s32.totalorder %s16, 1
    %p81 = por %p79, %p80
    %p83 = scmp.ne.s32.totalorder %s66, %s82
    %p84 = scmp.eq.s32.totalorder %s16, 0
    %p85 = por %p83, %p84
    %s86 = ssub.s32 %s17, %s29
    %s87 = ssub.s32 %s18, %s25
    %s88 = sor.u32 %s86, %s87
    %p89 = scmp.eq.s32.totalorder %s88, 0
    %s91 = sadd.s32 %s90, 1
    %s92 = scalar_select %p89, %s90, %s91
    %p95 = pneg %p89
    %p96 = scmp.eq.s32.totalorder %s10, 1
    %p97 = por %p95, %p96
    %p98 = scmp.ne.s32.totalorder %s90, %s93
    %p99 = scmp.eq.s32.totalorder %s10, 0
    %p100 = por %p98, %p99
    %p101 = scmp.ne.s32.totalorder %s90, %s93
    %p102 = scmp.eq.s32.totalorder %s15, 1
    %p103 = por %p101, %p102
    %p104 = scmp.ne.s32.totalorder %s93, %s94
    %p105 = scmp.eq.s32.totalorder %s15, 0
    %p106 = por %p104, %p105
    %p107 = scmp.ne.s32.totalorder %s93, %s94
    %p108 = scmp.eq.s32.totalorder %s16, 1
    %p109 = por %p107, %p108
    %p111 = scmp.ne.s32.totalorder %s94, %s110
    %p112 = scmp.eq.s32.totalorder %s16, 0
    %p113 = por %p111, %p112
    %s114 = ssub.s32 %s17, %s29
    %s115 = ssub.s32 %s18, %s25
    %s116 = sor.u32 %s114, %s115
    %p117 = scmp.eq.s32.totalorder %s116, 0
    %s119 = sadd.s32 %s118, 1
    %s120 = scalar_select %p117, %s118, %s119
    %p123 = pneg %p117
    %p124 = scmp.eq.s32.totalorder %s10, 1
    %p125 = por %p123, %p124
    %p126 = scmp.ne.s32.totalorder %s118, %s121
    %p127 = scmp.eq.s32.totalorder %s10, 0
    %p128 = por %p126, %p127
    %p129 = scmp.ne.s32.totalorder %s118, %s121
    %p130 = scmp.eq.s32.totalorder %s15, 1
    %p131 = por %p129, %p130
    %p132 = scmp.ne.s32.totalorder %s121, %s122
    %p133 = scmp.eq.s32.totalorder %s15, 0
    %p134 = por %p132, %p133
    %p135 = scmp.ne.s32.totalorder %s121, %s122
    %p136 = scmp.eq.s32.totalorder %s16, 1
    %p137 = por %p135, %p136
    %p139 = scmp.ne.s32.totalorder %s122, %s138
    %p140 = scmp.eq.s32.totalorder %s16, 0
    %p141 = por %p139, %p140
    %p142 = scmp.le.s32.totalorder 1, %s10
    %p143 = scmp.lt.s32.totalorder %s10, 3
    %p144 = pnand %p142, %p143
    %p145 = pneg %p144
    // Predicated region
    $region9: #{tpu_custom_call.1} parent=5 // pred_check
      _
    $region10: #{tpu_custom_call.1} parent=5 // pred_check_branch
      %147 = sbr.rel (%p144) target = $region12
    $region11: #{tpu_custom_call.1} parent=5 // pred_region
      %s148 = ssub.s32 %s10, 1
    $region12: #{tpu_custom_call.1} parent=5 // pred_fallthru
      _
    %p149 = scmp.lt.s32.totalorder %s10, 2
    // Predicated region
    $region13: #{tpu_custom_call.1} parent=5 // pred_check
      %p150 = pneg %p149
    $region14: #{tpu_custom_call.1} parent=5 // pred_check_branch
      %152 = sbr.rel (%p150) target = $region16
    $region15: #{tpu_custom_call.1} parent=5 // pred_region
      // Predicated region
      $region17: #{tpu_custom_call.1} parent=15 // pred_check
        %p153 = pneg %p44
      $region18: #{tpu_custom_call.1} parent=15 // pred_check_branch
        %155 = sbr.rel (%p153) target = $region20
      $region19: #{tpu_custom_call.1} parent=15 // pred_region
        %s156 = smul.u32 2, %s18
        %p157 = scmp.lt.s32.totalorder %s17, 1
        %s158 = scalar_select %p157, %s17, 1
        %p159 = scmp.lt.s32.totalorder %s156, 1
        %s160 = scalar_select %p159, %s156, 1
        %s161 = smul.addr %s158, 2
        %s162 = sadd.s32 %s160, %s161
        %s163 = smul.addr %s162, 8
        %s164 = scalar_lea.vmem %s0, %s163
        %s165 = smul.u32 2, %s18
      $region20: #{tpu_custom_call.1} parent=15 // pred_fallthru
        _
      // Predicated region
      $region21: #{tpu_custom_call.1} parent=15 // pred_check
        %p166 = pneg %p72
      $region22: #{tpu_custom_call.1} parent=15 // pred_check_branch
        %168 = sbr.rel (%p166) target = $region24
      $region23: #{tpu_custom_call.1} parent=15 // pred_region
        %s169 = smul.u32 2, %s18
        %p170 = scmp.lt.s32.totalorder %s17, 1
        %s171 = scalar_select %p170, %s17, 1
        %p172 = scmp.lt.s32.totalorder %s169, 1
        %s173 = scalar_select %p172, %s169, 1
        %s174 = smul.addr %s171, 2
        %s175 = sadd.s32 %s173, %s174
        %s176 = scalar_lea.vmem %s1, %s175
        %s177 = smul.u32 2, %s18
      $region24: #{tpu_custom_call.1} parent=15 // pred_fallthru
        _
    $region16: #{tpu_custom_call.1} parent=5 // pred_fallthru
      _
    %p178 = scmp.le.s32.totalorder 1, %s10
    %p179 = scmp.lt.s32.totalorder %s10, 3
    %p180 = pnand %p178, %p179
    %p181 = pneg %p180
    // Predicated region
    $region25: #{tpu_custom_call.1} parent=5 // pred_check
      _
    $region26: #{tpu_custom_call.1} parent=5 // pred_check_branch
      %183 = sbr.rel (%p180) target = $region28
    $region27: #{tpu_custom_call.1} parent=5 // pred_region
      %s184 = ssub.s32 %s10, 1
      %s185 = smul.u32 2, %s20
      %p186 = scmp.lt.s32.totalorder %s19, 1
      %s187 = scalar_select %p186, %s19, 1
      %p188 = scmp.lt.s32.totalorder %s185, 1
      %s189 = scalar_select %p188, %s185, 1
      %s190 = smul.addr %s187, 2
      %s191 = sadd.s32 %s189, %s190
      %s192 = smul.addr %s191, 8
      %s193 = scalar_lea.vmem %s0, %s192
      %p194 = pneg %p50
      %p195 = pneg %p47
      %s196 = smul.u32 2, %s20
      %p197 = scmp.lt.s32.totalorder %s19, 1
      %s198 = scalar_select %p197, %s19, 1
      %p199 = scmp.lt.s32.totalorder %s196, 1
      %s200 = scalar_select %p199, %s196, 1
      %s201 = smul.addr %s198, 2
      %s202 = sadd.s32 %s200, %s201
      %s203 = scalar_lea.vmem %s1, %s202
      %p204 = pneg %p78
      %p205 = pneg %p75
      %p206 = pneg %p106
      %p207 = pneg %p103
      %p208 = scmp.lt.s32.totalorder %s19, 1
      %s209 = scalar_select %p208, %s19, 1
      %p210 = scmp.lt.s32.totalorder %s20, 0
      %s211 = scalar_select %p210, %s20, 0
      %s212 = sadd.s32 %s211, %s209
      %s213 = scalar_lea.vmem %s2, %s212
      %p214 = pneg %p134
      %p215 = pneg %p131
      %p216 = scmp.lt.s32.totalorder %s19, 1
      %s217 = scalar_select %p216, %s19, 1
      %p218 = scmp.lt.s32.totalorder %s20, 0
      %s219 = scalar_select %p218, %s20, 0
      %s220 = sadd.s32 %s219, %s217
      %s221 = scalar_lea.vmem %s3, %s220
      %s222 = smul.u32 2, %s20
      %p223 = scmp.lt.s32.totalorder %s19, 1
      %s224 = scalar_select %p223, %s19, 1
      %p225 = scmp.lt.s32.totalorder %s222, 1
      %s226 = scalar_select %p225, %s222, 1
      %s227 = smul.addr %s224, 2
      %s228 = sadd.s32 %s226, %s227
      %s229 = smul.addr %s228, 8
      %s230 = scalar_lea.vmem %s0, %s229
      %s231 = smul.u32 2, %s20
      %s232 = smul.u32 2, %s20
      %p233 = scmp.lt.s32.totalorder %s19, 1
      %s234 = scalar_select %p233, %s19, 1
      %p235 = scmp.lt.s32.totalorder %s232, 1
      %s236 = scalar_select %p235, %s232, 1
      %s237 = smul.addr %s234, 2
      %s238 = sadd.s32 %s236, %s237
      %s239 = scalar_lea.vmem %s1, %s238
      %s240 = smul.u32 2, %s20
      %p241 = scmp.lt.s32.totalorder %s19, 1
      %s242 = scalar_select %p241, %s19, 1
      %p243 = scmp.lt.s32.totalorder %s20, 0
      %s244 = scalar_select %p243, %s20, 0
      %s245 = sadd.s32 %s244, %s242
      %s246 = scalar_lea.vmem %s2, %s245
      %p247 = scmp.lt.s32.totalorder %s19, 1
      %s248 = scalar_select %p247, %s19, 1
      %p249 = scmp.lt.s32.totalorder %s20, 0
      %s250 = scalar_select %p249, %s20, 0
      %s251 = sadd.s32 %s250, %s248
      %s252 = scalar_lea.vmem %s3, %s251
      %v253 = vlaneseq
      %v254 = vshrl.u32 %v253, 7
      %v255 = vld [vmem:[%s230] sm:$0x3f]
      %v256 = vld [vmem:[%s230 + $0x8] sm:$0x3f]
      %v257 = vld [vmem:[%s239] sm:$0x3]
      %vm258 = vcmask 1045504
      %v259 = vsel %vm258, %v255, -inf
      %v260 = vrot.slane %v259, 4
      %v261 = vmax.f32 %v259, %v260
      %v262 = vrot.slane %v261, 2
      %v263 = vmax.f32 %v261, %v262
      %v264 = vrot.slane %v263, 1
      %v265 = vmax.f32 %v263, %v264
      %v266 = vsel %vm258, %v256, -inf
      %v267 = vrot.slane %v266, 4
      %v268 = vmax.f32 %v266, %v267
      %v269 = vrot.slane %v268, 2
      %v270 = vmax.f32 %v268, %v269
      %v271 = vrot.slane %v270, 1
      %v272 = vmax.f32 %v270, %v271
      %v273 = vsub.f32 %v255, %v265
      %v274 = vsub.f32 %v256, %v272
      %v275 = vmul.f32 %v273, 1.442695
      %v276 = vpow.pop %v275
      %v277 = vmul.f32 %v274, 1.442695
      %v278 = vpow.pop %v277
      %v279 = vsel %vm258, %v276, 0.0
      %v280 = vrot.slane %v279, 4
      %v281 = vadd.f32 %v279, %v280
      %v282 = vrot.slane %v281, 2
      %v283 = vadd.f32 %v281, %v282
      %v284 = vrot.slane %v283, 1
      %v285 = vadd.f32 %v283, %v284
      %v286 = vsel %vm258, %v278, 0.0
      %v287 = vrot.slane %v286, 4
      %v288 = vadd.f32 %v286, %v287
      %v289 = vrot.slane %v288, 2
      %v290 = vadd.f32 %v288, %v289
      %v291 = vrot.slane %v290, 1
      %v292 = vadd.f32 %v290, %v291
      %v293 = vlog2.pop %v285
      %v294 = vmul.f32 %v293, 0.6931472
      %v295 = vlog2.pop %v292
      %v296 = vmul.f32 %v295, 0.6931472
      %v297 = vadd.f32 %v265, %v294
      %v298 = vadd.f32 %v272, %v296
      %vm299 = vcmask 1042432
      %v300 = vsel %vm299, %v255, -inf
      %v301 = vrot.slane %v300, 4
      %v302 = vmax.f32 %v300, %v301
      %v303 = vrot.slane %v302, 2
      %v304 = vmax.f32 %v302, %v303
      %v305 = vrot.slane %v304, 1
      %v306 = vmax.f32 %v304, %v305
      %v307 = vsel %vm299, %v256, -inf
      %v308 = vrot.slane %v307, 4
      %v309 = vmax.f32 %v307, %v308
      %v310 = vrot.slane %v309, 2
      %v311 = vmax.f32 %v309, %v310
      %v312 = vrot.slane %v311, 1
      %v313 = vmax.f32 %v311, %v312
      %v314 = vsub.f32 %v255, %v306
      %v315 = vsub.f32 %v256, %v313
      %v316 = vmul.f32 %v314, 1.442695
      %v317 = vpow.pop %v316
      %v318 = vmul.f32 %v315, 1.442695
      %v319 = vpow.pop %v318
      %v320 = vsel %vm299, %v317, 0.0
      %v321 = vrot.slane %v320, 4
      %v322 = vadd.f32 %v320, %v321
      %v323 = vrot.slane %v322, 2
      %v324 = vadd.f32 %v322, %v323
      %v325 = vrot.slane %v324, 1
      %v326 = vadd.f32 %v324, %v325
      %v327 = vsel %vm299, %v319, 0.0
      %v328 = vrot.slane %v327, 4
      %v329 = vadd.f32 %v327, %v328
      %v330 = vrot.slane %v329, 2
      %v331 = vadd.f32 %v329, %v330
      %v332 = vrot.slane %v331, 1
      %v333 = vadd.f32 %v331, %v332
      %v334 = vlog2.pop %v326
      %v335 = vmul.f32 %v334, 0.6931472
      %v336 = vlog2.pop %v333
      %v337 = vmul.f32 %v336, 0.6931472
      %v338 = vadd.f32 %v306, %v335
      %v339 = vadd.f32 %v313, %v337
      %v340 = vperm.slane %v257, 0
      %v341 = vperm.slane %v257, 1
      %vm342 = vcmp.eq.s32.totalorder %v254, %v340
      %vm343 = vcmp.eq.s32.totalorder %v254, %v341
      %v344 = vsel %vm342, %v255, 0.0
      %v345 = vsel %vm343, %v256, 0.0
      %v346 = vsel %vm258, %v344, 0.0
      %v347 = vrot.slane %v346, 4
      %v348 = vadd.f32 %v346, %v347
      %v349 = vrot.slane %v348, 2
      %v350 = vadd.f32 %v348, %v349
      %v351 = vrot.slane %v350, 1
      %v352 = vadd.f32 %v350, %v351
      %v353 = vsel %vm258, %v345, 0.0
      %v354 = vrot.slane %v353, 4
      %v355 = vadd.f32 %v353, %v354
      %v356 = vrot.slane %v355, 2
      %v357 = vadd.f32 %v355, %v356
      %v358 = vrot.slane %v357, 1
      %v359 = vadd.f32 %v357, %v358
      %vm360 = vcmp.lt.s32.totalorder %v257, 3
      %v361 = vsub.f32 %v297, %v338
      %v362 = vsub.f32 %v298, %v339
      %v363 = vsub.f32 %v297, %v352
      %v364 = vsub.f32 %v298, %v359
      %v367 = vrot.slane %v362, 7
      %vm368 = vcmask 1040384
      %v369 = vsel %vm368, %v361, %v367
      %v373 = vrot.slane %v364, 7
      %v374 = vsel %vm368, %v363, %v373
      %v376 = vsel %vm360, %v369, %v374
      %vm377 = vcmp.ne.s32.totalorder %v257, 255
      %v378 = vsel %vm377, %v376, 0.0
      %v380 = vperm.slane %v378, 0
      %v381 = vperm.slane %v378, 1
      %v384 = vsel %vm368, %v380, 0.0
      %v385 = vsel %vm368, %v381, 0.0
      %v386 = vadd.f32 %v384, %v385
      %387 = vadd.xlane.f32.xlu0 %v386
      %v388 = vpop.xlane.xlu0 %387
      %v389 = vrot.slane %v388, 4
      %v390 = vadd.f32 %v388, %v389
      %v391 = vrot.slane %v390, 2
      %v392 = vadd.f32 %v390, %v391
      %v393 = vrot.slane %v392, 1
      %v394 = vadd.f32 %v392, %v393
      %s395 = vtos %v394
      %v396 = vstv %s395
      %v397 = vadd.f32 %v396, 0.0
      %v398 = vsel %vm377, 1, 0
      %v399 = vcvt.s32.f32 %v398
      %v401 = vperm.slane %v399, 0
      %v402 = vperm.slane %v399, 1
      %v405 = vsel %vm368, %v401, 0.0
      %v406 = vsel %vm368, %v402, 0.0
      %v407 = vadd.f32 %v405, %v406
      %408 = vadd.xlane.f32.xlu0 %v407
      %v409 = vpop.xlane.xlu0 %408
      %v410 = vrot.slane %v409, 4
      %v411 = vadd.f32 %v409, %v410
      %v412 = vrot.slane %v411, 2
      %v413 = vadd.f32 %v411, %v412
      %v414 = vrot.slane %v413, 1
      %v415 = vadd.f32 %v413, %v414
      %s416 = vtos %v415
      %v417 = vstv %s416
      %v418 = vadd.f32 %v417, 0.0
      %vm419 = vcmask 0
      %420 = vst.msk [vmem:[%s246] sm:$0x1] %vm419, %v397
      %421 = vst.msk [vmem:[%s252] sm:$0x1] %vm419, %v418
      %p422 = scmp.lt.s32.totalorder %s19, 1
      %s423 = scalar_select %p422, %s19, 1
      %p424 = scmp.lt.s32.totalorder %s20, 0
      %s425 = scalar_select %p424, %s20, 0
      %s426 = sadd.s32 %s425, %s423
      %s427 = scalar_lea.vmem %s2, %s426
      %p428 = scmp.lt.s32.totalorder %s19, 1
      %s429 = scalar_select %p428, %s19, 1
      %p430 = scmp.lt.s32.totalorder %s20, 0
      %s431 = scalar_select %p430, %s20, 0
      %s432 = sadd.s32 %s431, %s429
      %s433 = scalar_lea.vmem %s3, %s432
      // Predicated region
      $region29: #{tpu_custom_call.1} parent=27 // pred_check
        %p434 = pneg %p103
      $region30: #{tpu_custom_call.1} parent=27 // pred_check_branch
        %436 = sbr.rel (%p434) target = $region32
      $region31: #{tpu_custom_call.1} parent=27 // pred_region
        _
      $region32: #{tpu_custom_call.1} parent=27 // pred_fallthru
        _
      // Predicated region
      $region33: #{tpu_custom_call.1} parent=27 // pred_check
        %p437 = pneg %p131
      $region34: #{tpu_custom_call.1} parent=27 // pred_check_branch
        %439 = sbr.rel (%p437) target = $region36
      $region35: #{tpu_custom_call.1} parent=27 // pred_region
        _
      $region36: #{tpu_custom_call.1} parent=27 // pred_fallthru
        _
    $region28: #{tpu_custom_call.1} parent=5 // pred_fallthru
      _
    %p440 = scmp.le.s32.totalorder 2, %s10
    // Predicated region
    $region37: #{tpu_custom_call.1} parent=5 // pred_check
      %p441 = pneg %p440
    $region38: #{tpu_custom_call.1} parent=5 // pred_check_branch
      %443 = sbr.rel (%p441) target = $region40
    $region39: #{tpu_custom_call.1} parent=5 // pred_region
      %s444 = ssub.s32 %s10, 2
      // Predicated region
      $region41: #{tpu_custom_call.1} parent=39 // pred_check
        %p445 = pneg %p109
      $region42: #{tpu_custom_call.1} parent=39 // pred_check_branch
        %447 = sbr.rel (%p445) target = $region44
      $region43: #{tpu_custom_call.1} parent=39 // pred_region
        %p448 = scmp.lt.s32.totalorder %s21, 1
        %s449 = scalar_select %p448, %s21, 1
        %p450 = scmp.lt.s32.totalorder %s22, 0
        %s451 = scalar_select %p450, %s22, 0
        %s452 = sadd.s32 %s451, %s449
        %s453 = scalar_lea.vmem %s2, %s452
      $region44: #{tpu_custom_call.1} parent=39 // pred_fallthru
        _
      // Predicated region
      $region45: #{tpu_custom_call.1} parent=39 // pred_check
        %p454 = pneg %p137
      $region46: #{tpu_custom_call.1} parent=39 // pred_check_branch
        %456 = sbr.rel (%p454) target = $region48
      $region47: #{tpu_custom_call.1} parent=39 // pred_region
        %p457 = scmp.lt.s32.totalorder %s21, 1
        %s458 = scalar_select %p457, %s21, 1
        %p459 = scmp.lt.s32.totalorder %s22, 0
        %s460 = scalar_select %p459, %s22, 0
        %s461 = sadd.s32 %s460, %s458
        %s462 = scalar_lea.vmem %s3, %s461
      $region48: #{tpu_custom_call.1} parent=39 // pred_fallthru
        _
    $region40: #{tpu_custom_call.1} parent=5 // pred_fallthru
      _
  $region6: #{tpu_custom_call.1} parent=0 // loop_footer
    %s14 = sadd.s32 1, %s10
  $region7: #{tpu_custom_call.1} parent=0 // loop_footer_branch
    %9 = sbr.rel target = $region3
  $region8: #{tpu_custom_call.1} parent=0 // loop_exit
    _

</llo_original>
